<compile_context>
chip_gen: v7x
topology: tpu7x:2x2x1
jax: 0.10.0
libtpu: 0.0.40
codegen_flags: <defaults>
</compile_context>

<pallas_src>
import jax
import jax.numpy as jnp
from jax.experimental import pallas as pl
from jax.experimental.pallas import tpu as pltpu

EPS = 1e-5


def _layernorm_kernel(x_ref, w_ref, b_ref, o_ref):
    # x_ref: (tile_rows, H) block in VMEM; w_ref/b_ref: (1, H), same block
    # every grid step (index_map returns (0, 0)), so they are not re-DMA'd.
    x = x_ref[...].astype(jnp.float32)
    w = w_ref[...].astype(jnp.float32)
    b = b_ref[...].astype(jnp.float32)

    mean = jnp.mean(x, axis=-1, keepdims=True)
    xc = x - mean
    var = jnp.mean(xc * xc, axis=-1, keepdims=True)
    inv = jax.lax.rsqrt(var + EPS)          # EUP slot, effectively free

    o_ref[...] = (xc * inv * w + b).astype(o_ref.dtype)


def _vmem_capacity_bytes():
    """Physical VMEM of the current chip (128 MiB v5e/v6e, 64 MiB v7x)."""
    try:
        info = pltpu.get_tpu_info()
        cap = getattr(info, "vmem_capacity_bytes", None)
        if cap:
            return int(cap)
    except Exception:
        pass
    return 64 * 1024 * 1024  # conservative default (v7x-sized)


def _choose_tile_rows(rows, hidden, itemsize, tile_budget_bytes):
    """Pick (tile_rows, padded_rows).

    Largest sublane-aligned row tile whose double-buffered I/O plus f32
    temporaries fit the budget, preferring tiles that divide `rows` exactly so
    no HBM pad-copy is needed.
    """
    # Per-row VMEM footprint: 2 input + 2 output buffers (double-buffered
    # pipeline) in the input dtype, plus ~3 full-tile f32 temporaries for the
    # upcast compute path.
    bytes_per_row = hidden * (4 * itemsize + 3 * 4)
    t_max = int(tile_budget_bytes // max(bytes_per_row, 1))
    t_max = min(t_max, 1024, max(rows, 1))

    # Sublane-packing granule for the input dtype (8 f32, 16 bf16, 32 int8).
    granule = max(8, 32 // max(itemsize, 1))

    if t_max < granule:
        # Tiny problem: one block covering every row (full-extent block is
        # legal regardless of the (8,128) divisibility rule).
        return rows, rows

    t_max = (t_max // granule) * granule

    # Prefer an aligned divisor of rows -> no padding, no extra HBM traffic.
    for t in range(t_max, granule - 1, -granule):
        if rows % t == 0:
            return t, rows

    # Rare fallback: no aligned divisor; pad rows up to a multiple of t_max.
    padded_rows = pl.cdiv(rows, t_max) * t_max
    return t_max, padded_rows


def sequence_parallel_wrapper_forward(x, weight, bias):
    """Forward of SequenceParallelWrapper(LayerNorm(hidden)).

    x: [batch, seq, hidden]; weight, bias: [hidden]
    """
    B, S, H = x.shape
    rows = B * S
    itemsize = jnp.dtype(x.dtype).itemsize

    # Generation-aware sizing; explicit vmem_limit_bytes so large tiles are
    # not capped by the default scoped-VMEM limit.
    capacity = _vmem_capacity_bytes()
    vmem_limit = min(int(capacity * 3 // 4), 96 * 1024 * 1024)
    tile_budget = vmem_limit // 2  # headroom for compiler temporaries

    tile_rows, padded_rows = _choose_tile_rows(rows, H, itemsize, tile_budget)

    x2d = x.reshape(rows, H)
    if padded_rows != rows:
        # Fallback only; the divisor search above makes this rare.
        x2d = jnp.pad(x2d, ((0, padded_rows - rows), (0, 0)))
    w2d = weight.reshape(1, H)
    b2d = bias.reshape(1, H)

    grid = (padded_rows // tile_rows,)

    out2d = pl.pallas_call(
        _layernorm_kernel,
        out_shape=jax.ShapeDtypeStruct((padded_rows, H), x.dtype),
        grid_spec=pltpu.PrefetchScalarGridSpec(
            num_scalar_prefetch=0,
            grid=grid,
            in_specs=[
                pl.BlockSpec((tile_rows, H), lambda i: (i, 0)),
                pl.BlockSpec((1, H), lambda i: (0, 0)),
                pl.BlockSpec((1, H), lambda i: (0, 0)),
            ],
            out_specs=pl.BlockSpec((tile_rows, H), lambda i: (i, 0)),
        ),
        compiler_params=pltpu.CompilerParams(
            # Single row-tile axis: "parallel" lets the grid shard across the
            # two TensorCores per chip on v7x (harmless on v5e/v6e).
            dimension_semantics=("parallel",),
            vmem_limit_bytes=int(vmem_limit),
        ),
    )(x2d, w2d, b2d)

    if padded_rows != rows:
        out2d = out2d[:rows]
    return out2d.reshape(B, S, H)


# jit once; tile selection happens from static shapes at trace time.
sequence_parallel_wrapper_forward = jax.jit(sequence_parallel_wrapper_forward)


if __name__ == "__main__":
    # Small test shape.  Note: H=32 (< 128 lanes) is legal here only because
    # the block covers the full hidden dim; production shapes should keep the
    # hidden (lane) dimension a multiple of 128 for unmasked lane-dense stores.
    batch, seq, hidden = 2, 8, 32

    key = jax.random.PRNGKey(0)
    kx, kw, kb = jax.random.split(key, 3)

    x = jax.random.normal(kx, (batch, seq, hidden), dtype=jnp.float32)
    # nn.LayerNorm default init is weight=1, bias=0; perturb deterministically
    # so scale/shift broadcasting is actually exercised.
    weight = 1.0 + 0.1 * jax.random.normal(kw, (hidden,), dtype=jnp.float32)
    bias = 0.1 * jax.random.normal(kb, (hidden,), dtype=jnp.float32)

    out = sequence_parallel_wrapper_forward(x, weight, bias)
    out = jax.block_until_ready(out)

    # Pure-JAX reference check of LayerNorm semantics.
    mean = jnp.mean(x, axis=-1, keepdims=True)
    var = jnp.mean((x - mean) ** 2, axis=-1, keepdims=True)
    ref = (x - mean) * jax.lax.rsqrt(var + EPS) * weight + bias
    assert jnp.allclose(out, ref, atol=1e-5, rtol=1e-5), "mismatch vs reference"

    # TODO(synk): the DTensor/SequenceParallel parallelize_plan (sharding
    # metadata) has no single-kernel Pallas equivalent; only the forward pass
    # of the wrapped norm is implemented here.

    print("KERNEL_OK")
</pallas_src>

<mosaic_0001>
module attributes {stable_mosaic.version = 11 : i64} {
  func.func @_layernorm_kernel(%arg0: i32, %arg1: memref<16x32xf32, #tpu.memory_space<vmem>>, %arg2: memref<1x32xf32, #tpu.memory_space<vmem>>, %arg3: memref<1x32xf32, #tpu.memory_space<vmem>>, %arg4: memref<16x32xf32, #tpu.memory_space<vmem>>) attributes {dimension_semantics = [#tpu.dimension_semantics<parallel>], iteration_bounds = array<i64: 1>, scalar_prefetch = 0 : i64, scratch_operands = 0 : i64, tpu.core_type = #tpu.core_type<tc>, window_params = [{transform_indices = @transform_0, window_bounds = array<i64: 16, 32>}, {pipeline_mode = #tpu.pipeline_mode<synchronous>, transform_indices = @transform_1, window_bounds = array<i64: 1, 32>}, {pipeline_mode = #tpu.pipeline_mode<synchronous>, transform_indices = @transform_2, window_bounds = array<i64: 1, 32>}, {transform_indices = @transform_3, window_bounds = array<i64: 16, 32>}]} {
    %c0 = arith.constant 0 : index
    %c0_0 = arith.constant 0 : index
    %0 = vector.load %arg1[%c0, %c0_0] : memref<16x32xf32, #tpu.memory_space<vmem>>, vector<16x32xf32>
    %c0_1 = arith.constant 0 : index
    %c0_2 = arith.constant 0 : index
    %1 = vector.load %arg2[%c0_1, %c0_2] : memref<1x32xf32, #tpu.memory_space<vmem>>, vector<1x32xf32>
    %c0_3 = arith.constant 0 : index
    %c0_4 = arith.constant 0 : index
    %2 = vector.load %arg3[%c0_3, %c0_4] : memref<1x32xf32, #tpu.memory_space<vmem>>, vector<1x32xf32>
    %cst = arith.constant dense<0.000000e+00> : vector<16xf32>
    %3 = vector.multi_reduction <add>, %0, %cst [1] : vector<16x32xf32> to vector<16xf32>
    %4 = vector.shape_cast %3 : vector<16xf32> to vector<16x1xf32>
    %cst_5 = arith.constant 3.200000e+01 : f32
    %5 = vector.broadcast %cst_5 : f32 to vector<16x1xf32>
    %6 = arith.divf %4, %5 : vector<16x1xf32>
    %7 = vector.broadcast %6 : vector<16x1xf32> to vector<16x32xf32>
    %8 = arith.subf %0, %7 : vector<16x32xf32>
    %9 = arith.mulf %8, %8 : vector<16x32xf32>
    %cst_6 = arith.constant dense<0.000000e+00> : vector<16xf32>
    %10 = vector.multi_reduction <add>, %9, %cst_6 [1] : vector<16x32xf32> to vector<16xf32>
    %11 = vector.shape_cast %10 : vector<16xf32> to vector<16x1xf32>
    %cst_7 = arith.constant 3.200000e+01 : f32
    %12 = vector.broadcast %cst_7 : f32 to vector<16x1xf32>
    %13 = arith.divf %11, %12 : vector<16x1xf32>
    %cst_8 = arith.constant 9.99999974E-6 : f32
    %14 = vector.broadcast %cst_8 : f32 to vector<16x1xf32>
    %15 = arith.addf %13, %14 : vector<16x1xf32>
    %16 = math.rsqrt %15 : vector<16x1xf32>
    %17 = vector.broadcast %16 : vector<16x1xf32> to vector<16x32xf32>
    %18 = arith.mulf %8, %17 : vector<16x32xf32>
    %19 = vector.broadcast %1 : vector<1x32xf32> to vector<16x32xf32>
    %20 = arith.mulf %18, %19 : vector<16x32xf32>
    %21 = vector.broadcast %2 : vector<1x32xf32> to vector<16x32xf32>
    %22 = arith.addf %20, %21 : vector<16x32xf32>
    %c0_9 = arith.constant 0 : index
    %c0_10 = arith.constant 0 : index
    %23 = vector.load %arg4[%c0_9, %c0_10] : memref<16x32xf32, #tpu.memory_space<vmem>>, vector<16x32xf32>
    tpu.vector_store %arg4[%c0_9, %c0_10], %22 {strides = array<i32>} : memref<16x32xf32, #tpu.memory_space<vmem>>, vector<16x32xf32>,
    return
  }
  func.func @transform_0(%arg0: i32) -> (i32, i32) {
    %c0_i32 = arith.constant 0 : i32
    %c0_i32_0 = arith.constant 0 : i32
    return %arg0, %c0_i32 : i32, i32
  }
  func.func @transform_1(%arg0: i32) -> (i32, i32) {
    %c0_i32 = arith.constant 0 : i32
    %c0_i32_0 = arith.constant 0 : i32
    %c0_i32_1 = arith.constant 0 : i32
    return %c0_i32, %c0_i32_0 : i32, i32
  }
  func.func @transform_2(%arg0: i32) -> (i32, i32) {
    %c0_i32 = arith.constant 0 : i32
    %c0_i32_0 = arith.constant 0 : i32
    %c0_i32_1 = arith.constant 0 : i32
    return %c0_i32, %c0_i32_0 : i32, i32
  }
  func.func @transform_3(%arg0: i32) -> (i32, i32) {
    %c0_i32 = arith.constant 0 : i32
    %c0_i32_0 = arith.constant 0 : i32
    return %arg0, %c0_i32 : i32, i32
  }
}

</mosaic_0001>

<llo_original>
// kernel: sequence_parallel_wrapper_forward.1
$region0: #{sequence_parallel_wrapper_forward.1}
  #allocation0 [shape = 'u32[]', space=smem, size = 0x4, offset = 0x4, fixed_abs, tag = 'smem constant byte address 0x4 - core index']
  #allocation1 [shape = 'u32[144,128]{1,0:T(1,128)}', space=vmem, size = 0x12000, scoped, tag = 'internal scratch']
  %s0 = inlined_call_operand.hbm [shape: f32[16,32], index: 0, kind: input, shape index: {}]
  %s1 = inlined_call_operand.vmem [shape: f32[1,32], index: 1, kind: input, shape index: {}]
  %s2 = inlined_call_operand.vmem [shape: f32[1,32], index: 2, kind: input, shape index: {}]
  %s3 = inlined_call_operand.hbm [shape: f32[16,32], index: 3, kind: output, shape index: {}]
  %s4 = sld [smem:[#allocation0]]
  $region26: #{sequence_parallel_wrapper_forward.1} parent=0
    _
  %s6 = ssub.s32 1, %s4
  %s7 = scalar_select 0, %s6, %s4
  $region1: #{sequence_parallel_wrapper_forward.1} parent=0
    #allocation2 [shape = 'u8[8192]{0}', space=vmem, size = 0x2000, scoped, tag = 'input window, operand 0, single buffered']
    #allocation3 [shape = 's32[1]{0}', space=sflag, size = 0x4, scoped, tag = 'scoped memory for sequence_parallel_wrapper_forward.1']
    #allocation4 [shape = 's32[1]{0}', space=sflag, size = 0x4, scoped, tag = 'scoped memory for sequence_parallel_wrapper_forward.1']
    #allocation5 [shape = 'u8[8192]{0}', space=vmem, size = 0x2000, scoped, tag = 'output window, operand 0, single buffered']
    %8 = vsyncpa [#allocation3], 0
    %9 = vsyncpa [#allocation4], 0
    // Predicated region
    $region2: #{sequence_parallel_wrapper_forward.1} parent=1 // pred_check
      _
    $region3: #{sequence_parallel_wrapper_forward.1} parent=1 // pred_check_branch
      %11 = sbr.rel (0) target = $region5
    $region4: #{sequence_parallel_wrapper_forward.1} parent=1 // pred_region
      %s13 = ssub.s32 256, 256
      %14 = vsyncadd [#allocation3], %s13
      %s15 = sshll.u32 [#allocation2], 4
      %s16 = int_to_ptr.vmem [resolvable:$true] %s15
      %21 = dma.hbm_to_vmem [thread:$0]  %s0, 256, %s16, [#allocation3], 128, 128, 8
    $region5: #{sequence_parallel_wrapper_forward.1} parent=1 // pred_fallthru
      _
    // Predicated region
    $region6: #{sequence_parallel_wrapper_forward.1} parent=1 // pred_check
      _
    $region7: #{sequence_parallel_wrapper_forward.1} parent=1 // pred_check_branch
      %23 = sbr.rel (0) target = $region9
    $region8: #{sequence_parallel_wrapper_forward.1} parent=1 // pred_region
      _
    $region9: #{sequence_parallel_wrapper_forward.1} parent=1 // pred_fallthru
      _
    // Predicated region
    $region10: #{sequence_parallel_wrapper_forward.1} parent=1 // pred_check
      _
    $region11: #{sequence_parallel_wrapper_forward.1} parent=1 // pred_check_branch
      %25 = sbr.rel (0) target = $region13
    $region12: #{sequence_parallel_wrapper_forward.1} parent=1 // pred_region
      _
    $region13: #{sequence_parallel_wrapper_forward.1} parent=1 // pred_fallthru
      _
    // Predicated region
    $region14: #{sequence_parallel_wrapper_forward.1} parent=1 // pred_check
      _
    $region15: #{sequence_parallel_wrapper_forward.1} parent=1 // pred_check_branch
      %27 = sbr.rel (0) target = $region17
    $region16: #{sequence_parallel_wrapper_forward.1} parent=1 // pred_region
      %28 = dma.done [#allocation3], 256
    $region17: #{sequence_parallel_wrapper_forward.1} parent=1 // pred_fallthru
      _
    %v29 = vld [vmem:[#allocation2] sm:$0xff]
    %v30 = vld [vmem:[#allocation2 + $0x8] sm:$0xff]
    %v31 = vld [vmem:[%s1] sm:$0x1]
    %v32 = vld [vmem:[%s2] sm:$0x1]
    %vm33 = vcmask 261120
    %v34 = vsel %vm33, %v29, 0.0
    %35 = vadd.xlane.f32.xlu0 %v34
    %v36 = vpop.xlane.xlu0 %35
    %v37 = vsel %vm33, %v30, 0.0
    %38 = vadd.xlane.f32.xlu0 %v37
    %v39 = vpop.xlane.xlu0 %38
    %v40 = vrcp.pop 32.0
    %v41 = vmul.f32 %v36, %v40
    %v42 = vmul.f32 %v39, %v40
    %v43 = vsub.f32 %v29, %v41
    %v44 = vsub.f32 %v30, %v42
    %v45 = vmul.f32 %v43, %v43
    %v46 = vmul.f32 %v44, %v44
    %v47 = vsel %vm33, %v45, 0.0
    %48 = vadd.xlane.f32.xlu0 %v47
    %v49 = vpop.xlane.xlu0 %48
    %v50 = vsel %vm33, %v46, 0.0
    %51 = vadd.xlane.f32.xlu0 %v50
    %v52 = vpop.xlane.xlu0 %51
    %v53 = vmul.f32 %v49, %v40
    %v54 = vmul.f32 %v52, %v40
    %v55 = vadd.f32 %v53, 1e-05
    %v56 = vadd.f32 %v54, 1e-05
    %v57 = vrsqrt.pop %v55
    %v58 = vrsqrt.pop %v56
    %v59 = vmul.f32 %v43, %v57
    %v60 = vmul.f32 %v44, %v58
    %v62 = vlaneseq
    %v63 = vshrl.u32 %v62, 7
    %v64 = vsub.s32 0, %v63
    %v65 = vrot.slane %v31, %v64
    %v67 = vmul.f32 %v59, %v65
    %v68 = vmul.f32 %v60, %v65
    %v70 = vlaneseq
    %v71 = vshrl.u32 %v70, 7
    %v72 = vsub.s32 0, %v71
    %v73 = vrot.slane %v32, %v72
    %v75 = vadd.f32 %v67, %v73
    %v76 = vadd.f32 %v68, %v73
    %77 = vst.msk [vmem:[#allocation5] sm:$0xff] %vm33, %v75
    %78 = vst.msk [vmem:[#allocation5 + $0x8] sm:$0xff] %vm33, %v76
    // Predicated region
    $region18: #{sequence_parallel_wrapper_forward.1} parent=1 // pred_check
      _
    $region19: #{sequence_parallel_wrapper_forward.1} parent=1 // pred_check_branch
      %80 = sbr.rel (0) target = $region21
    $region20: #{sequence_parallel_wrapper_forward.1} parent=1 // pred_region
      %s82 = ssub.s32 256, 256
      %83 = vsyncadd [#allocation4], %s82
      %s84 = sshll.u32 [#allocation5], 4
      %s85 = int_to_ptr.vmem [resolvable:$true] %s84
      %90 = dma.vmem_to_hbm [thread:$0]  %s85, 256, %s3, [#allocation4], 128, 128, 8
    $region21: #{sequence_parallel_wrapper_forward.1} parent=1 // pred_fallthru
      _
    // Predicated region
    $region22: #{sequence_parallel_wrapper_forward.1} parent=1 // pred_check
      _
    $region23: #{sequence_parallel_wrapper_forward.1} parent=1 // pred_check_branch
      %92 = sbr.rel (0) target = $region25
    $region24: #{sequence_parallel_wrapper_forward.1} parent=1 // pred_region
      %93 = dma.done [#allocation4], 256
    $region25: #{sequence_parallel_wrapper_forward.1} parent=1 // pred_fallthru
      _
    %94 = vsyncpa [#allocation3], 1
    %95 = vsyncpa [#allocation4], 1

</llo_original>
